<compile_context>
chip_gen: v7x
topology: tpu7x:2x2x1
jax: 0.10.0
libtpu: 0.0.40
codegen_flags: <defaults>
</compile_context>

<pallas_src>
import jax
import jax.numpy as jnp
from jax.experimental import pallas as pl
from jax.experimental.pallas import tpu as pltpu

_H1 = 256        # encode_fc1 / decode_fc1 width
_H2 = 64         # true bottleneck width
_H2_PAD = 128    # bottleneck zero-padded to a full lane width (keep at 128)
_LANE = 128
_SUBLANE = 8


def _round_up(n, m):
    return ((n + m - 1) // m) * m


def _ae_kernel(x_ref,
               w1_ref, b1_ref,
               w2_ref, b2_ref,
               w3_ref, b3_ref,
               w4_ref, b4_ref,
               out_ref):
    """One (TB, F_pad) batch tile: bf16 matmuls, f32 accum, f32 bias+ReLU."""
    x = x_ref[...].astype(jnp.bfloat16)          # cast on the VPU, not in XLA
    h = jnp.dot(x, w1_ref[...], preferred_element_type=jnp.float32)
    h = jnp.maximum(h + b1_ref[...], 0.0)

    h = jnp.dot(h.astype(jnp.bfloat16), w2_ref[...],
                preferred_element_type=jnp.float32)
    h = jnp.maximum(h + b2_ref[...], 0.0)

    h = jnp.dot(h.astype(jnp.bfloat16), w3_ref[...],
                preferred_element_type=jnp.float32)
    h = jnp.maximum(h + b3_ref[...], 0.0)

    h = jnp.dot(h.astype(jnp.bfloat16), w4_ref[...],
                preferred_element_type=jnp.float32)
    out_ref[...] = jnp.maximum(h + b4_ref[...], 0.0).astype(out_ref.dtype)


def prepare_params(params, input_nodes):
    """Pad + bf16-cast weights ONCE (hoisted out of the per-forward path).

    w1:(F,256)->(F_pad,256) zero rows   (padded input features)
    w2:(256,64)->(256,128)  zero cols   (extra bottleneck units -> ReLU(0)=0)
    w3:(64,256)->(128,256)  zero rows   (padded units contribute nothing)
    w4:(256,F)->(256,F_pad) zero cols   (padded outputs sliced away)
    Biases stay f32.
    """
    f_pad = _round_up(input_nodes, _LANE)
    w1 = jnp.pad(params["w1"], ((0, f_pad - input_nodes), (0, 0)))
    w2 = jnp.pad(params["w2"], ((0, 0), (0, _H2_PAD - _H2)))
    w3 = jnp.pad(params["w3"], ((0, _H2_PAD - _H2), (0, 0)))
    w4 = jnp.pad(params["w4"], ((0, 0), (0, f_pad - input_nodes)))
    b2 = jnp.pad(params["b2"], ((0, 0), (0, _H2_PAD - _H2)))
    b4 = jnp.pad(params["b4"], ((0, 0), (0, f_pad - input_nodes)))
    bf16 = lambda w: w.astype(jnp.bfloat16)
    return (bf16(w1), params["b1"], bf16(w2), b2,
            bf16(w3), params["b3"], bf16(w4), b4)


def _max_batch_tile(f_pad, out_itemsize):
    """Largest TB keeping tiles + intermediates under ~24 MiB of VMEM."""
    budget = 24 << 20
    per_row = (2 * f_pad * 4               # double-buffered f32 x tile
               + 2 * f_pad * out_itemsize  # double-buffered out tile
               + 6 * f_pad                 # bf16 x cast + f32 pre-store copy
               + 3 * _H1 * 4               # f32/bf16 256-wide intermediates
               + 6 * _H2_PAD)              # f32/bf16 bottleneck intermediates
    return max(_SUBLANE, (budget // per_row) // _SUBLANE * _SUBLANE)


def ae_forward(x, params, *, batch_tile=1024, out_dtype=jnp.float32):
    """x: (batch, input_nodes) f32.  params: dict from init_params OR the
    tuple returned by prepare_params (preferred: prepare once, reuse).

    Returns (batch, input_nodes) of out_dtype (f32 default; bf16 halves the
    writeback bytes in the bandwidth-bound regime, e.g. v6e).
    """
    batch, input_nodes = x.shape
    f_pad = _round_up(input_nodes, _LANE)

    weight_args = (prepare_params(params, input_nodes)
                   if isinstance(params, dict) else tuple(params))
    assert weight_args[0].shape == (f_pad, _H1), (
        "prepared params were built for a different input width")

    out_itemsize = jnp.dtype(out_dtype).itemsize

    # --- batch tiling ------------------------------------------------------
    # Cap TB by the VMEM budget, then force >= 2 grid steps whenever there are
    # at least 16 rows so the "parallel" batch axis lands on both v7x
    # TensorCores (a single extra step is harmless on v5e/v6e).
    batch_tile = max(_SUBLANE,
                     min(batch_tile, _max_batch_tile(f_pad, out_itemsize)))
    b_rounded = _round_up(batch, _SUBLANE)
    n_steps = pl.cdiv(b_rounded, batch_tile)
    if b_rounded >= 2 * _SUBLANE:
        n_steps = max(n_steps, 2)
    tb = _round_up(pl.cdiv(b_rounded, n_steps), _SUBLANE)
    n_steps = pl.cdiv(b_rounded, tb)
    b_pad = tb * n_steps

    # x stays f32 in HBM; the kernel casts to bf16 on-chip.
    if b_pad == batch and f_pad == input_nodes:
        x_pad = x
    else:
        x_pad = jnp.pad(x, ((0, b_pad - batch), (0, f_pad - input_nodes)))

    # Resident weights/biases: constant index_map, whole-array block.
    # (Single-buffering them would save only ~0.5 MiB at F_pad=128, so keep
    # the portable default double-buffering.)
    const_spec = lambda a: pl.BlockSpec(a.shape, lambda i: (0, 0))

    weight_bytes = sum(int(a.size) * a.dtype.itemsize for a in weight_args)
    flops = 2 * b_pad * (f_pad * _H1 + _H1 * _H2_PAD + _H2_PAD * _H1 + _H1 * f_pad)
    bytes_accessed = (b_pad * f_pad * 4 + b_pad * f_pad * out_itemsize
                      + weight_bytes)
    cost = pl.CostEstimate(flops=flops, transcendentals=0,
                           bytes_accessed=bytes_accessed)

    # Scoped-VMEM limit sized from the actual buffers (v5e's default is only
    # ~16 MiB); never below the 32 MiB v6e/v7x default, never above v7x's
    # 64 MiB physical VMEM.
    io_bytes = 2 * tb * f_pad * 4 + 2 * tb * f_pad * out_itemsize
    inter_bytes = tb * (6 * f_pad + 3 * _H1 * 4 + 6 * _H2_PAD)
    vmem_limit = int(max(32 << 20,
                         min(64 << 20,
                             2 * (io_bytes + 2 * weight_bytes + inter_bytes))))

    out = pl.pallas_call(
        _ae_kernel,
        out_shape=jax.ShapeDtypeStruct((b_pad, f_pad), out_dtype),
        grid=(n_steps,),
        in_specs=[pl.BlockSpec((tb, f_pad), lambda i: (i, 0))]
                 + [const_spec(a) for a in weight_args],
        out_specs=pl.BlockSpec((tb, f_pad), lambda i: (i, 0)),
        compiler_params=pltpu.CompilerParams(
            dimension_semantics=("parallel",),
            vmem_limit_bytes=vmem_limit),
        cost_estimate=cost,
    )(x_pad, *weight_args)

    if b_pad == batch and f_pad == input_nodes:
        return out
    return out[:batch, :input_nodes]


def init_params(key, input_nodes):
    """nn.Linear-style init (uniform +/- 1/sqrt(fan_in)), stored as (in, out)."""
    dims = [(input_nodes, _H1), (_H1, _H2), (_H2, _H1), (_H1, input_nodes)]
    params = {}
    keys = jax.random.split(key, 2 * len(dims))
    for i, (fan_in, fan_out) in enumerate(dims):
        bound = 1.0 / (fan_in ** 0.5)
        params[f"w{i + 1}"] = jax.random.uniform(
            keys[2 * i], (fan_in, fan_out), minval=-bound, maxval=bound,
            dtype=jnp.float32)
        params[f"b{i + 1}"] = jax.random.uniform(
            keys[2 * i + 1], (1, fan_out), minval=-bound, maxval=bound,
            dtype=jnp.float32)
    return params


def ae_forward_ref(x, params, dtype=jnp.float32):
    """Pure-JAX reference; dtype controls matmul operand precision."""
    h = x
    for i in range(1, 5):
        h = jnp.dot(h.astype(dtype), params[f"w{i}"].astype(dtype),
                    preferred_element_type=jnp.float32)
        h = jnp.maximum(h + params[f"b{i}"], 0.0)
    return h


if __name__ == "__main__":
    key = jax.random.PRNGKey(0)
    k_param, k_x, k_x2 = jax.random.split(key, 3)

    input_nodes = 128
    batch = 16

    params = init_params(k_param, input_nodes)
    x = jax.random.normal(k_x, (batch, input_nodes), dtype=jnp.float32)

    # Hoisted weight prep: pad + bf16-cast once, reuse across forwards.
    prepared = prepare_params(params, input_nodes)

    out = jax.block_until_ready(ae_forward(x, prepared))
    assert out.shape == (batch, input_nodes) and out.dtype == jnp.float32

    # Raw-dict path (pads/casts weights inline) must match the prepared path.
    out_raw = jax.block_until_ready(ae_forward(x, params))

    # Different batch tilings must not change results
    # (32 rows -> tb=16/grid=2 by default vs tb=8/grid=4 with batch_tile=8).
    x32 = jax.random.normal(k_x2, (32, input_nodes), dtype=jnp.float32)
    out32_a = jax.block_until_ready(ae_forward(x32, prepared))
    out32_b = jax.block_until_ready(ae_forward(x32, prepared, batch_tile=8))

    # Unaligned batch exercises the pad / slice path.
    x_odd = x32[:13]
    out_odd = jax.block_until_ready(ae_forward(x_odd, prepared))

    # Optional bf16 output (writeback-bandwidth saver, mainly v6e).
    out_bf16 = jax.block_until_ready(
        ae_forward(x, prepared, out_dtype=jnp.bfloat16))

    ref_bf16 = ae_forward_ref(x, params, dtype=jnp.bfloat16)   # kernel numerics
    ref_f32 = ae_forward_ref(x, params, dtype=jnp.float32)     # full-precision spec
    ref32 = ae_forward_ref(x32, params, dtype=jnp.bfloat16)

    assert jnp.allclose(out, ref_bf16, atol=1e-2, rtol=1e-2), "mismatch vs bf16 ref"
    assert jnp.allclose(out, ref_f32, atol=6e-2, rtol=6e-2), "mismatch vs f32 ref"
    assert jnp.allclose(out, out_raw, atol=1e-6, rtol=1e-6), "prepared vs raw params"
    assert jnp.allclose(out32_a, out32_b, atol=1e-6, rtol=1e-6), "tile-size dependence"
    assert jnp.allclose(out32_a, ref32, atol=1e-2, rtol=1e-2), "mismatch (batch=32)"
    assert jnp.allclose(out_odd, ref32[:13], atol=1e-2, rtol=1e-2), "mismatch (batch=13)"
    assert jnp.allclose(out_bf16.astype(jnp.float32), ref_bf16,
                        atol=5e-2, rtol=5e-2), "mismatch (bf16 out)"

    print("KERNEL_OK")
</pallas_src>

<mosaic_0001>
module attributes {stable_mosaic.version = 11 : i64} {
  func.func @_ae_kernel(%arg0: i32, %arg1: memref<8x128xf32, #tpu.memory_space<vmem>>, %arg2: memref<128x256xbf16, #tpu.memory_space<vmem>>, %arg3: memref<1x256xf32, #tpu.memory_space<vmem>>, %arg4: memref<256x128xbf16, #tpu.memory_space<vmem>>, %arg5: memref<1x128xf32, #tpu.memory_space<vmem>>, %arg6: memref<128x256xbf16, #tpu.memory_space<vmem>>, %arg7: memref<1x256xf32, #tpu.memory_space<vmem>>, %arg8: memref<256x128xbf16, #tpu.memory_space<vmem>>, %arg9: memref<1x128xf32, #tpu.memory_space<vmem>>, %arg10: memref<8x128xf32, #tpu.memory_space<vmem>>) attributes {dimension_semantics = [#tpu.dimension_semantics<parallel>], iteration_bounds = array<i64: 2>, scalar_prefetch = 0 : i64, scratch_operands = 0 : i64, tpu.core_type = #tpu.core_type<tc>, window_params = [{transform_indices = @transform_0, window_bounds = array<i64: 8, 128>}, {pipeline_mode = #tpu.pipeline_mode<synchronous>, transform_indices = @transform_1, window_bounds = array<i64: 128, 256>}, {pipeline_mode = #tpu.pipeline_mode<synchronous>, transform_indices = @transform_2, window_bounds = array<i64: 1, 256>}, {pipeline_mode = #tpu.pipeline_mode<synchronous>, transform_indices = @transform_3, window_bounds = array<i64: 256, 128>}, {pipeline_mode = #tpu.pipeline_mode<synchronous>, transform_indices = @transform_4, window_bounds = array<i64: 1, 128>}, {pipeline_mode = #tpu.pipeline_mode<synchronous>, transform_indices = @transform_5, window_bounds = array<i64: 128, 256>}, {pipeline_mode = #tpu.pipeline_mode<synchronous>, transform_indices = @transform_6, window_bounds = array<i64: 1, 256>}, {pipeline_mode = #tpu.pipeline_mode<synchronous>, transform_indices = @transform_7, window_bounds = array<i64: 256, 128>}, {pipeline_mode = #tpu.pipeline_mode<synchronous>, transform_indices = @transform_8, window_bounds = array<i64: 1, 128>}, {transform_indices = @transform_9, window_bounds = array<i64: 8, 128>}]} {
    %c0 = arith.constant 0 : index
    %c0_0 = arith.constant 0 : index
    %0 = vector.load %arg1[%c0, %c0_0] : memref<8x128xf32, #tpu.memory_space<vmem>>, vector<8x128xf32>
    %1 = arith.truncf %0 : vector<8x128xf32> to vector<8x128xbf16>
    %c0_1 = arith.constant 0 : index
    %c0_2 = arith.constant 0 : index
    %2 = vector.load %arg2[%c0_1, %c0_2] : memref<128x256xbf16, #tpu.memory_space<vmem>>, vector<128x256xbf16>
    %cst = arith.constant dense<0.000000e+00> : vector<8x256xf32>
    %3 = tpu.matmul %1, %2, %cst {dimension_numbers = #tpu.dot_dimension_numbers<[1], [0], [0], [1], [0, 0, 1, 1], [], []>} : vector<8x128xbf16>, vector<128x256xbf16>, vector<8x256xf32> -> vector<8x256xf32>
    %c0_3 = arith.constant 0 : index
    %c0_4 = arith.constant 0 : index
    %4 = vector.load %arg3[%c0_3, %c0_4] : memref<1x256xf32, #tpu.memory_space<vmem>>, vector<1x256xf32>
    %5 = vector.broadcast %4 : vector<1x256xf32> to vector<8x256xf32>
    %6 = arith.addf %3, %5 : vector<8x256xf32>
    %cst_5 = arith.constant 0.000000e+00 : f32
    %7 = vector.broadcast %cst_5 : f32 to vector<8x256xf32>
    %8 = arith.maximumf %6, %7 : vector<8x256xf32>
    %9 = arith.truncf %8 : vector<8x256xf32> to vector<8x256xbf16>
    %c0_6 = arith.constant 0 : index
    %c0_7 = arith.constant 0 : index
    %10 = vector.load %arg4[%c0_6, %c0_7] : memref<256x128xbf16, #tpu.memory_space<vmem>>, vector<256x128xbf16>
    %cst_8 = arith.constant dense<0.000000e+00> : vector<8x128xf32>
    %11 = tpu.matmul %9, %10, %cst_8 {dimension_numbers = #tpu.dot_dimension_numbers<[1], [0], [0], [1], [0, 0, 1, 1], [], []>} : vector<8x256xbf16>, vector<256x128xbf16>, vector<8x128xf32> -> vector<8x128xf32>
    %c0_9 = arith.constant 0 : index
    %c0_10 = arith.constant 0 : index
    %12 = vector.load %arg5[%c0_9, %c0_10] : memref<1x128xf32, #tpu.memory_space<vmem>>, vector<1x128xf32>
    %13 = vector.broadcast %12 : vector<1x128xf32> to vector<8x128xf32>
    %14 = arith.addf %11, %13 : vector<8x128xf32>
    %cst_11 = arith.constant 0.000000e+00 : f32
    %15 = vector.broadcast %cst_11 : f32 to vector<8x128xf32>
    %16 = arith.maximumf %14, %15 : vector<8x128xf32>
    %17 = arith.truncf %16 : vector<8x128xf32> to vector<8x128xbf16>
    %c0_12 = arith.constant 0 : index
    %c0_13 = arith.constant 0 : index
    %18 = vector.load %arg6[%c0_12, %c0_13] : memref<128x256xbf16, #tpu.memory_space<vmem>>, vector<128x256xbf16>
    %cst_14 = arith.constant dense<0.000000e+00> : vector<8x256xf32>
    %19 = tpu.matmul %17, %18, %cst_14 {dimension_numbers = #tpu.dot_dimension_numbers<[1], [0], [0], [1], [0, 0, 1, 1], [], []>} : vector<8x128xbf16>, vector<128x256xbf16>, vector<8x256xf32> -> vector<8x256xf32>
    %c0_15 = arith.constant 0 : index
    %c0_16 = arith.constant 0 : index
    %20 = vector.load %arg7[%c0_15, %c0_16] : memref<1x256xf32, #tpu.memory_space<vmem>>, vector<1x256xf32>
    %21 = vector.broadcast %20 : vector<1x256xf32> to vector<8x256xf32>
    %22 = arith.addf %19, %21 : vector<8x256xf32>
    %cst_17 = arith.constant 0.000000e+00 : f32
    %23 = vector.broadcast %cst_17 : f32 to vector<8x256xf32>
    %24 = arith.maximumf %22, %23 : vector<8x256xf32>
    %25 = arith.truncf %24 : vector<8x256xf32> to vector<8x256xbf16>
    %c0_18 = arith.constant 0 : index
    %c0_19 = arith.constant 0 : index
    %26 = vector.load %arg8[%c0_18, %c0_19] : memref<256x128xbf16, #tpu.memory_space<vmem>>, vector<256x128xbf16>
    %cst_20 = arith.constant dense<0.000000e+00> : vector<8x128xf32>
    %27 = tpu.matmul %25, %26, %cst_20 {dimension_numbers = #tpu.dot_dimension_numbers<[1], [0], [0], [1], [0, 0, 1, 1], [], []>} : vector<8x256xbf16>, vector<256x128xbf16>, vector<8x128xf32> -> vector<8x128xf32>
    %c0_21 = arith.constant 0 : index
    %c0_22 = arith.constant 0 : index
    %28 = vector.load %arg9[%c0_21, %c0_22] : memref<1x128xf32, #tpu.memory_space<vmem>>, vector<1x128xf32>
    %29 = vector.broadcast %28 : vector<1x128xf32> to vector<8x128xf32>
    %30 = arith.addf %27, %29 : vector<8x128xf32>
    %cst_23 = arith.constant 0.000000e+00 : f32
    %31 = vector.broadcast %cst_23 : f32 to vector<8x128xf32>
    %32 = arith.maximumf %30, %31 : vector<8x128xf32>
    %c0_24 = arith.constant 0 : index
    %c0_25 = arith.constant 0 : index
    %33 = vector.load %arg10[%c0_24, %c0_25] : memref<8x128xf32, #tpu.memory_space<vmem>>, vector<8x128xf32>
    tpu.vector_store %arg10[%c0_24, %c0_25], %32 {strides = array<i32>} : memref<8x128xf32, #tpu.memory_space<vmem>>, vector<8x128xf32>,
    return
  }
  func.func @transform_0(%arg0: i32) -> (i32, i32) {
    %c0_i32 = arith.constant 0 : i32
    %c0_i32_0 = arith.constant 0 : i32
    return %arg0, %c0_i32 : i32, i32
  }
  func.func @transform_1(%arg0: i32) -> (i32, i32) {
    %c0_i32 = arith.constant 0 : i32
    %c0_i32_0 = arith.constant 0 : i32
    %c0_i32_1 = arith.constant 0 : i32
    return %c0_i32, %c0_i32_0 : i32, i32
  }
  func.func @transform_2(%arg0: i32) -> (i32, i32) {
    %c0_i32 = arith.constant 0 : i32
    %c0_i32_0 = arith.constant 0 : i32
    %c0_i32_1 = arith.constant 0 : i32
    return %c0_i32, %c0_i32_0 : i32, i32
  }
  func.func @transform_3(%arg0: i32) -> (i32, i32) {
    %c0_i32 = arith.constant 0 : i32
    %c0_i32_0 = arith.constant 0 : i32
    %c0_i32_1 = arith.constant 0 : i32
    return %c0_i32, %c0_i32_0 : i32, i32
  }
  func.func @transform_4(%arg0: i32) -> (i32, i32) {
    %c0_i32 = arith.constant 0 : i32
    %c0_i32_0 = arith.constant 0 : i32
    %c0_i32_1 = arith.constant 0 : i32
    return %c0_i32, %c0_i32_0 : i32, i32
  }
  func.func @transform_5(%arg0: i32) -> (i32, i32) {
    %c0_i32 = arith.constant 0 : i32
    %c0_i32_0 = arith.constant 0 : i32
    %c0_i32_1 = arith.constant 0 : i32
    return %c0_i32, %c0_i32_0 : i32, i32
  }
  func.func @transform_6(%arg0: i32) -> (i32, i32) {
    %c0_i32 = arith.constant 0 : i32
    %c0_i32_0 = arith.constant 0 : i32
    %c0_i32_1 = arith.constant 0 : i32
    return %c0_i32, %c0_i32_0 : i32, i32
  }
  func.func @transform_7(%arg0: i32) -> (i32, i32) {
    %c0_i32 = arith.constant 0 : i32
    %c0_i32_0 = arith.constant 0 : i32
    %c0_i32_1 = arith.constant 0 : i32
    return %c0_i32, %c0_i32_0 : i32, i32
  }
  func.func @transform_8(%arg0: i32) -> (i32, i32) {
    %c0_i32 = arith.constant 0 : i32
    %c0_i32_0 = arith.constant 0 : i32
    %c0_i32_1 = arith.constant 0 : i32
    return %c0_i32, %c0_i32_0 : i32, i32
  }
  func.func @transform_9(%arg0: i32) -> (i32, i32) {
    %c0_i32 = arith.constant 0 : i32
    %c0_i32_0 = arith.constant 0 : i32
    return %arg0, %c0_i32 : i32, i32
  }
}

</mosaic_0001>

<llo_original>
// kernel: tpu_custom_call.1
$region0: #{tpu_custom_call.1}
  #allocation0 [shape = 'u32[]', space=smem, size = 0x4, offset = 0x4, fixed_abs, tag = 'smem constant byte address 0x4 - core index']
  #allocation1 [shape = 'u32[144,128]{1,0:T(1,128)}', space=vmem, size = 0x12000, scoped, tag = 'internal scratch']
  %s0 = inlined_call_operand.hbm [shape: f32[16,128], index: 0, kind: input, shape index: {}]
  %s1 = inlined_call_operand.hbm [shape: bf16[128,256], index: 1, kind: input, shape index: {}]
  %s2 = inlined_call_operand.vmem [shape: f32[1,256], index: 2, kind: input, shape index: {}]
  %s3 = inlined_call_operand.hbm [shape: bf16[256,128], index: 3, kind: input, shape index: {}]
  %s4 = inlined_call_operand.vmem [shape: f32[1,128], index: 4, kind: input, shape index: {}]
  %s5 = inlined_call_operand.hbm [shape: bf16[128,256], index: 5, kind: input, shape index: {}]
  %s6 = inlined_call_operand.vmem [shape: f32[1,256], index: 6, kind: input, shape index: {}]
  %s7 = inlined_call_operand.hbm [shape: bf16[256,128], index: 7, kind: input, shape index: {}]
  %s8 = inlined_call_operand.vmem [shape: f32[1,128], index: 8, kind: input, shape index: {}]
  %s9 = inlined_call_operand.hbm [shape: f32[16,128], index: 9, kind: output, shape index: {}]
  %s10 = sld [smem:[#allocation0]]
  $region89: #{tpu_custom_call.1} parent=0
    _
  %s12 = ssub.s32 1, %s10
  %s13 = scalar_select 0, %s12, %s10
  $region1: #{tpu_custom_call.1} parent=0
    #allocation2 [shape = 'u8[8192]{0}', space=vmem, size = 0x2000, scoped, tag = 'input window, operand 0']
    #allocation3 [shape = 's32[2]{0}', space=sflag, size = 0x8, scoped, tag = 'scoped memory for tpu_custom_call.1']
    #allocation4 [shape = 's32[2]{0}', space=sflag, size = 0x8, scoped, tag = 'scoped memory for tpu_custom_call.1']
    #allocation5 [shape = 'u8[65536]{0}', space=vmem, size = 0x10000, scoped, tag = 'input window, operand 1, single buffered']
    #allocation6 [shape = 's32[1]{0}', space=sflag, size = 0x4, scoped, tag = 'scoped memory for tpu_custom_call.1']
    #allocation7 [shape = 'u8[65536]{0}', space=vmem, size = 0x10000, scoped, tag = 'input window, operand 3, single buffered']
    #allocation8 [shape = 'u8[65536]{0}', space=vmem, size = 0x10000, scoped, tag = 'input window, operand 5, single buffered']
    #allocation9 [shape = 's32[1]{0}', space=sflag, size = 0x4, scoped, tag = 'scoped memory for tpu_custom_call.1']
    #allocation10 [shape = 'u8[65536]{0}', space=vmem, size = 0x10000, scoped, tag = 'input window, operand 7, single buffered']
    #allocation11 [shape = 'u8[8192]{0}', space=vmem, size = 0x2000, scoped, tag = 'output window, operand 0']
    %14 = vsyncpa [#allocation3], 0
    %s15 = scalar_lea.sflag [#allocation3], 1
    %16 = vsyncpa %s15, 0
    %17 = vsyncpa [#allocation6], 0
    %18 = vsyncpa [#allocation9], 0
    %19 = vsyncpa [#allocation4], 0
    %s20 = scalar_lea.sflag [#allocation4], 1
    %21 = vsyncpa %s20, 0
    loop: start=0, step=1, limit=4
    $region2: #{tpu_custom_call.1} parent=1 // loop_pre_header
      _
    $region3: #{tpu_custom_call.1} parent=1 // loop_header
      %s23 = sphi 0, %s27
      %p24 = scmp.ge.s32.totalorder %s23, 4
      %s33 = sphi 0, %s35
      %s36 = sphi 0, %s33
      %s37 = sphi 0, %s36
      %s53 = sphi 0, %s37
      %s57 = sphi 0, %s57
      %s59 = sphi 0, %s57
      %s60 = sphi 0, %s59
      %s74 = sphi 0, %s60
      %s78 = sphi 0, %s78
      %s80 = sphi 0, %s78
      %s81 = sphi 0, %s80
      %s95 = sphi 0, %s81
      %s99 = sphi 0, %s99
      %s101 = sphi 0, %s99
      %s102 = sphi 0, %s101
      %s116 = sphi 0, %s102
      %s120 = sphi 0, %s120
      %s122 = sphi 0, %s120
      %s123 = sphi 0, %s122
      %s137 = sphi 0, %s123
      %s141 = sphi 0, %s141
      %s143 = sphi 0, %s141
      %s144 = sphi 0, %s143
      %s158 = sphi 0, %s144
      %s162 = sphi 0, %s162
      %s164 = sphi 0, %s162
      %s165 = sphi 0, %s164
      %s179 = sphi 0, %s165
      %s183 = sphi 0, %s183
      %s185 = sphi 0, %s183
      %s186 = sphi 0, %s185
      %s200 = sphi 0, %s186
      %s204 = sphi 0, %s204
      %s206 = sphi 0, %s204
      %s207 = sphi 0, %s206
      %s221 = sphi 0, %s207
      %s227 = sphi 0, %s229
      %s230 = sphi 0, %s227
      %s231 = sphi 0, %s230
      %s247 = sphi 0, %s231
    $region4: #{tpu_custom_call.1} parent=1 // loop_header_branch
      %26 = sbr.rel (%p24) target = $region8
    $region5: #{tpu_custom_call.1} parent=1 // loop_body
      %s28 = ssub.s32 %s23, 1
      %s29 = ssub.s32 %s23, 2
      %s30 = sadd.s32 %s23, 1
      %s31 = ssub.s32 %s23, %s30
      %p32 = scmp.eq.s32.totalorder %s31, 0
      %s34 = sadd.s32 %s33, 1
      %s35 = scalar_select %p32, %s33, %s34
      %p38 = pneg %p32
      %p39 = scmp.eq.s32.totalorder %s23, 1
      %p40 = por %p38, %p39
      %p41 = scmp.ne.s32.totalorder %s33, %s36
      %p42 = scmp.eq.s32.totalorder %s23, 0
      %p43 = por %p41, %p42
      %p44 = scmp.ne.s32.totalorder %s33, %s36
      %p45 = scmp.eq.s32.totalorder %s28, 1
      %p46 = por %p44, %p45
      %p47 = scmp.ne.s32.totalorder %s36, %s37
      %p48 = scmp.eq.s32.totalorder %s28, 0
      %p49 = por %p47, %p48
      %p50 = scmp.ne.s32.totalorder %s36, %s37
      %p51 = scmp.eq.s32.totalorder %s29, 1
      %p52 = por %p50, %p51
      %p54 = scmp.ne.s32.totalorder %s37, %s53
      %p55 = scmp.eq.s32.totalorder %s29, 0
      %p56 = por %p54, %p55
      %s58 = sadd.s32 %s57, 1
      %p61 = scmp.eq.s32.totalorder %s23, 1
      %p62 = scmp.ne.s32.totalorder %s57, %s59
      %p63 = scmp.eq.s32.totalorder %s23, 0
      %p64 = por %p62, %p63
      %p65 = scmp.ne.s32.totalorder %s57, %s59
      %p66 = scmp.eq.s32.totalorder %s28, 1
      %p67 = por %p65, %p66
      %p68 = scmp.ne.s32.totalorder %s59, %s60
      %p69 = scmp.eq.s32.totalorder %s28, 0
      %p70 = por %p68, %p69
      %p71 = scmp.ne.s32.totalorder %s59, %s60
      %p72 = scmp.eq.s32.totalorder %s29, 1
      %p73 = por %p71, %p72
      %p75 = scmp.ne.s32.totalorder %s60, %s74
      %p76 = scmp.eq.s32.totalorder %s29, 0
      %p77 = por %p75, %p76
      %s79 = sadd.s32 %s78, 1
      %p82 = scmp.eq.s32.totalorder %s23, 1
      %p83 = scmp.ne.s32.totalorder %s78, %s80
      %p84 = scmp.eq.s32.totalorder %s23, 0
      %p85 = por %p83, %p84
      %p86 = scmp.ne.s32.totalorder %s78, %s80
      %p87 = scmp.eq.s32.totalorder %s28, 1
      %p88 = por %p86, %p87
      %p89 = scmp.ne.s32.totalorder %s80, %s81
      %p90 = scmp.eq.s32.totalorder %s28, 0
      %p91 = por %p89, %p90
      %p92 = scmp.ne.s32.totalorder %s80, %s81
      %p93 = scmp.eq.s32.totalorder %s29, 1
      %p94 = por %p92, %p93
      %p96 = scmp.ne.s32.totalorder %s81, %s95
      %p97 = scmp.eq.s32.totalorder %s29, 0
      %p98 = por %p96, %p97
      %s100 = sadd.s32 %s99, 1
      %p103 = scmp.eq.s32.totalorder %s23, 1
      %p104 = scmp.ne.s32.totalorder %s99, %s101
      %p105 = scmp.eq.s32.totalorder %s23, 0
      %p106 = por %p104, %p105
      %p107 = scmp.ne.s32.totalorder %s99, %s101
      %p108 = scmp.eq.s32.totalorder %s28, 1
      %p109 = por %p107, %p108
      %p110 = scmp.ne.s32.totalorder %s101, %s102
      %p111 = scmp.eq.s32.totalorder %s28, 0
      %p112 = por %p110, %p111
      %p113 = scmp.ne.s32.totalorder %s101, %s102
      %p114 = scmp.eq.s32.totalorder %s29, 1
      %p115 = por %p113, %p114
      %p117 = scmp.ne.s32.totalorder %s102, %s116
      %p118 = scmp.eq.s32.totalorder %s29, 0
      %p119 = por %p117, %p118
      %s121 = sadd.s32 %s120, 1
      %p124 = scmp.eq.s32.totalorder %s23, 1
      %p125 = scmp.ne.s32.totalorder %s120, %s122
      %p126 = scmp.eq.s32.totalorder %s23, 0
      %p127 = por %p125, %p126
      %p128 = scmp.ne.s32.totalorder %s120, %s122
      %p129 = scmp.eq.s32.totalorder %s28, 1
      %p130 = por %p128, %p129
      %p131 = scmp.ne.s32.totalorder %s122, %s123
      %p132 = scmp.eq.s32.totalorder %s28, 0
      %p133 = por %p131, %p132
      %p134 = scmp.ne.s32.totalorder %s122, %s123
      %p135 = scmp.eq.s32.totalorder %s29, 1
      %p136 = por %p134, %p135
      %p138 = scmp.ne.s32.totalorder %s123, %s137
      %p139 = scmp.eq.s32.totalorder %s29, 0
      %p140 = por %p138, %p139
      %s142 = sadd.s32 %s141, 1
      %p145 = scmp.eq.s32.totalorder %s23, 1
      %p146 = scmp.ne.s32.totalorder %s141, %s143
      %p147 = scmp.eq.s32.totalorder %s23, 0
      %p148 = por %p146, %p147
      %p149 = scmp.ne.s32.totalorder %s141, %s143
      %p150 = scmp.eq.s32.totalorder %s28, 1
      %p151 = por %p149, %p150
      %p152 = scmp.ne.s32.totalorder %s143, %s144
      %p153 = scmp.eq.s32.totalorder %s28, 0
      %p154 = por %p152, %p153
      %p155 = scmp.ne.s32.totalorder %s143, %s144
      %p156 = scmp.eq.s32.totalorder %s29, 1
      %p157 = por %p155, %p156
      %p159 = scmp.ne.s32.totalorder %s144, %s158
      %p160 = scmp.eq.s32.totalorder %s29, 0
      %p161 = por %p159, %p160
      %s163 = sadd.s32 %s162, 1
      %p166 = scmp.eq.s32.totalorder %s23, 1
      %p167 = scmp.ne.s32.totalorder %s162, %s164
      %p168 = scmp.eq.s32.totalorder %s23, 0
      %p169 = por %p167, %p168
      %p170 = scmp.ne.s32.totalorder %s162, %s164
      %p171 = scmp.eq.s32.totalorder %s28, 1
      %p172 = por %p170, %p171
      %p173 = scmp.ne.s32.totalorder %s164, %s165
      %p174 = scmp.eq.s32.totalorder %s28, 0
      %p175 = por %p173, %p174
      %p176 = scmp.ne.s32.totalorder %s164, %s165
      %p177 = scmp.eq.s32.totalorder %s29, 1
      %p178 = por %p176, %p177
      %p180 = scmp.ne.s32.totalorder %s165, %s179
      %p181 = scmp.eq.s32.totalorder %s29, 0
      %p182 = por %p180, %p181
      %s184 = sadd.s32 %s183, 1
      %p187 = scmp.eq.s32.totalorder %s23, 1
      %p188 = scmp.ne.s32.totalorder %s183, %s185
      %p189 = scmp.eq.s32.totalorder %s23, 0
      %p190 = por %p188, %p189
      %p191 = scmp.ne.s32.totalorder %s183, %s185
      %p192 = scmp.eq.s32.totalorder %s28, 1
      %p193 = por %p191, %p192
      %p194 = scmp.ne.s32.totalorder %s185, %s186
      %p195 = scmp.eq.s32.totalorder %s28, 0
      %p196 = por %p194, %p195
      %p197 = scmp.ne.s32.totalorder %s185, %s186
      %p198 = scmp.eq.s32.totalorder %s29, 1
      %p199 = por %p197, %p198
      %p201 = scmp.ne.s32.totalorder %s186, %s200
      %p202 = scmp.eq.s32.totalorder %s29, 0
      %p203 = por %p201, %p202
      %s205 = sadd.s32 %s204, 1
      %p208 = scmp.eq.s32.totalorder %s23, 1
      %p209 = scmp.ne.s32.totalorder %s204, %s206
      %p210 = scmp.eq.s32.totalorder %s23, 0
      %p211 = por %p209, %p210
      %p212 = scmp.ne.s32.totalorder %s204, %s206
      %p213 = scmp.eq.s32.totalorder %s28, 1
      %p214 = por %p212, %p213
      %p215 = scmp.ne.s32.totalorder %s206, %s207
      %p216 = scmp.eq.s32.totalorder %s28, 0
      %p217 = por %p215, %p216
      %p218 = scmp.ne.s32.totalorder %s206, %s207
      %p219 = scmp.eq.s32.totalorder %s29, 1
      %p220 = por %p218, %p219
      %p222 = scmp.ne.s32.totalorder %s207, %s221
      %p223 = scmp.eq.s32.totalorder %s29, 0
      %p224 = por %p222, %p223
      %s225 = ssub.s32 %s23, %s30
      %p226 = scmp.eq.s32.totalorder %s225, 0
      %s228 = sadd.s32 %s227, 1
      %s229 = scalar_select %p226, %s227, %s228
      %p232 = pneg %p226
      %p233 = scmp.eq.s32.totalorder %s23, 1
      %p234 = por %p232, %p233
      %p235 = scmp.ne.s32.totalorder %s227, %s230
      %p236 = scmp.eq.s32.totalorder %s23, 0
      %p237 = por %p235, %p236
      %p238 = scmp.ne.s32.totalorder %s227, %s230
      %p239 = scmp.eq.s32.totalorder %s28, 1
      %p240 = por %p238, %p239
      %p241 = scmp.ne.s32.totalorder %s230, %s231
      %p242 = scmp.eq.s32.totalorder %s28, 0
      %p243 = por %p241, %p242
      %p244 = scmp.ne.s32.totalorder %s230, %s231
      %p245 = scmp.eq.s32.totalorder %s29, 1
      %p246 = por %p244, %p245
      %p248 = scmp.ne.s32.totalorder %s231, %s247
      %p249 = scmp.eq.s32.totalorder %s29, 0
      %p250 = por %p248, %p249
      %p251 = scmp.le.s32.totalorder 1, %s23
      %p252 = scmp.lt.s32.totalorder %s23, 3
      %p253 = pnand %p251, %p252
      %p254 = pneg %p253
      // Predicated region
      $region9: #{tpu_custom_call.1} parent=5 // pred_check
        _
      $region10: #{tpu_custom_call.1} parent=5 // pred_check_branch
        %256 = sbr.rel (%p253) target = $region12
      $region11: #{tpu_custom_call.1} parent=5 // pred_region
        %s257 = ssub.s32 %s23, 1
        // Predicated region
        $region13: #{tpu_custom_call.1} parent=11 // pred_check
          %p258 = pneg %p70
        $region14: #{tpu_custom_call.1} parent=11 // pred_check_branch
          %260 = sbr.rel (%p258) target = $region16
        $region15: #{tpu_custom_call.1} parent=11 // pred_region
          %s262 = ssub.s32 2048, 2048
          %263 = vsyncadd [#allocation6], %s262
          %s264 = sshll.u32 [#allocation5], 4
          %s265 = int_to_ptr.vmem [resolvable:$true] %s264
          %270 = dma.hbm_to_vmem [thread:$0]  %s1, 2048, %s265, [#allocation6], 128, 128, 8
        $region16: #{tpu_custom_call.1} parent=11 // pred_fallthru
          _
        // Predicated region
        $region17: #{tpu_custom_call.1} parent=11 // pred_check
          %p271 = pneg %p91
        $region18: #{tpu_custom_call.1} parent=11 // pred_check_branch
          %273 = sbr.rel (%p271) target = $region20
        $region19: #{tpu_custom_call.1} parent=11 // pred_region
          _
        $region20: #{tpu_custom_call.1} parent=11 // pred_fallthru
          _
        // Predicated region
        $region21: #{tpu_custom_call.1} parent=11 // pred_check
          %p274 = pneg %p112
        $region22: #{tpu_custom_call.1} parent=11 // pred_check_branch
          %276 = sbr.rel (%p274) target = $region24
        $region23: #{tpu_custom_call.1} parent=11 // pred_region
          %s278 = ssub.s32 2048, 2048
          %279 = vsyncadd [#allocation6], %s278
          %s280 = sshll.u32 [#allocation7], 4
          %s281 = int_to_ptr.vmem [resolvable:$true] %s280
          %286 = dma.hbm_to_vmem [thread:$0]  %s3, 2048, %s281, [#allocation6], 64, 64, 4
        $region24: #{tpu_custom_call.1} parent=11 // pred_fallthru
          _
        // Predicated region
        $region25: #{tpu_custom_call.1} parent=11 // pred_check
          %p287 = pneg %p133
        $region26: #{tpu_custom_call.1} parent=11 // pred_check_branch
          %289 = sbr.rel (%p287) target = $region28
        $region27: #{tpu_custom_call.1} parent=11 // pred_region
          _
        $region28: #{tpu_custom_call.1} parent=11 // pred_fallthru
          _
        // Predicated region
        $region29: #{tpu_custom_call.1} parent=11 // pred_check
          %p290 = pneg %p154
        $region30: #{tpu_custom_call.1} parent=11 // pred_check_branch
          %292 = sbr.rel (%p290) target = $region32
        $region31: #{tpu_custom_call.1} parent=11 // pred_region
          %s294 = ssub.s32 2048, 2048
          %295 = vsyncadd [#allocation9], %s294
          %s296 = sshll.u32 [#allocation8], 4
          %s297 = int_to_ptr.vmem [resolvable:$true] %s296
          %302 = dma.hbm_to_vmem [thread:$0]  %s5, 2048, %s297, [#allocation9], 128, 128, 8
        $region32: #{tpu_custom_call.1} parent=11 // pred_fallthru
          _
        // Predicated region
        $region33: #{tpu_custom_call.1} parent=11 // pred_check
          %p303 = pneg %p175
        $region34: #{tpu_custom_call.1} parent=11 // pred_check_branch
          %305 = sbr.rel (%p303) target = $region36
        $region35: #{tpu_custom_call.1} parent=11 // pred_region
          _
        $region36: #{tpu_custom_call.1} parent=11 // pred_fallthru
          _
        // Predicated region
        $region37: #{tpu_custom_call.1} parent=11 // pred_check
          %p306 = pneg %p196
        $region38: #{tpu_custom_call.1} parent=11 // pred_check_branch
          %308 = sbr.rel (%p306) target = $region40
        $region39: #{tpu_custom_call.1} parent=11 // pred_region
          %s310 = ssub.s32 2048, 2048
          %311 = vsyncadd [#allocation9], %s310
          %s312 = sshll.u32 [#allocation10], 4
          %s313 = int_to_ptr.vmem [resolvable:$true] %s312
          %318 = dma.hbm_to_vmem [thread:$0]  %s7, 2048, %s313, [#allocation9], 64, 64, 4
        $region40: #{tpu_custom_call.1} parent=11 // pred_fallthru
          _
        // Predicated region
        $region41: #{tpu_custom_call.1} parent=11 // pred_check
          %p319 = pneg %p217
        $region42: #{tpu_custom_call.1} parent=11 // pred_check_branch
          %321 = sbr.rel (%p319) target = $region44
        $region43: #{tpu_custom_call.1} parent=11 // pred_region
          _
        $region44: #{tpu_custom_call.1} parent=11 // pred_fallthru
          _
      $region12: #{tpu_custom_call.1} parent=5 // pred_fallthru
        _
      %p322 = scmp.lt.s32.totalorder %s23, 2
      // Predicated region
      $region45: #{tpu_custom_call.1} parent=5 // pred_check
        %p323 = pneg %p322
      $region46: #{tpu_custom_call.1} parent=5 // pred_check_branch
        %325 = sbr.rel (%p323) target = $region48
      $region47: #{tpu_custom_call.1} parent=5 // pred_region
        // Predicated region
        $region49: #{tpu_custom_call.1} parent=47 // pred_check
          %p326 = pneg %p43
        $region50: #{tpu_custom_call.1} parent=47 // pred_check_branch
          %328 = sbr.rel (%p326) target = $region52
        $region51: #{tpu_custom_call.1} parent=47 // pred_region
          %s329 = sand.u32 %s33, 1
          %s330 = scalar_lea.sflag [#allocation3], %s329
          %s331 = sand.u32 %s33, 1
          %s332 = smul.addr %s331, 8
          %s333 = scalar_lea.vmem [#allocation2], %s332
          %s335 = ssub.s32 128, 128
          %336 = vsyncadd %s330, %s335
          %s337 = smul.addr %s23, 128
          %s338 = scalar_lea.hbm %s0, %s337
          %s340 = sshll.u32 %s333, 4
          %s341 = int_to_ptr.vmem [resolvable:$true] %s340
          %343 = dma.hbm_to_vmem [thread:$0]  %s338, 128, %s341, %s330
        $region52: #{tpu_custom_call.1} parent=47 // pred_fallthru
          _
      $region48: #{tpu_custom_call.1} parent=5 // pred_fallthru
        _
      %p344 = scmp.le.s32.totalorder 1, %s23
      %p345 = scmp.lt.s32.totalorder %s23, 3
      %p346 = pnand %p344, %p345
      %p347 = pneg %p346
      // Predicated region
      $region53: #{tpu_custom_call.1} parent=5 // pred_check
        _
      $region54: #{tpu_custom_call.1} parent=5 // pred_check_branch
        %349 = sbr.rel (%p346) target = $region56
      $region55: #{tpu_custom_call.1} parent=5 // pred_region
        %s350 = ssub.s32 %s23, 1
        %s351 = sand.u32 %s36, 1
        %s352 = scalar_lea.sflag [#allocation3], %s351
        %s353 = sand.u32 %s36, 1
        %s354 = smul.addr %s353, 8
        %s355 = scalar_lea.vmem [#allocation2], %s354
        // Predicated region
        $region57: #{tpu_custom_call.1} parent=55 // pred_check
          %p356 = pneg %p49
        $region58: #{tpu_custom_call.1} parent=55 // pred_check_branch
          %358 = sbr.rel (%p356) target = $region60
        $region59: #{tpu_custom_call.1} parent=55 // pred_region
          %359 = dma.done %s352, 128
        $region60: #{tpu_custom_call.1} parent=55 // pred_fallthru
          _
        // Predicated region
        $region61: #{tpu_custom_call.1} parent=55 // pred_check
          %p360 = pneg %p70
        $region62: #{tpu_custom_call.1} parent=55 // pred_check_branch
          %362 = sbr.rel (%p360) target = $region64
        $region63: #{tpu_custom_call.1} parent=55 // pred_region
          %363 = dma.done [#allocation6], 2048
        $region64: #{tpu_custom_call.1} parent=55 // pred_fallthru
          _
        // Predicated region
        $region65: #{tpu_custom_call.1} parent=55 // pred_check
          %p364 = pneg %p112
        $region66: #{tpu_custom_call.1} parent=55 // pred_check_branch
          %366 = sbr.rel (%p364) target = $region68
        $region67: #{tpu_custom_call.1} parent=55 // pred_region
          %367 = dma.done [#allocation6], 2048
        $region68: #{tpu_custom_call.1} parent=55 // pred_fallthru
          _
        // Predicated region
        $region69: #{tpu_custom_call.1} parent=55 // pred_check
          %p368 = pneg %p154
        $region70: #{tpu_custom_call.1} parent=55 // pred_check_branch
          %370 = sbr.rel (%p368) target = $region72
        $region71: #{tpu_custom_call.1} parent=55 // pred_region
          %371 = dma.done [#allocation9], 2048
        $region72: #{tpu_custom_call.1} parent=55 // pred_fallthru
          _
        // Predicated region
        $region73: #{tpu_custom_call.1} parent=55 // pred_check
          %p372 = pneg %p196
        $region74: #{tpu_custom_call.1} parent=55 // pred_check_branch
          %374 = sbr.rel (%p372) target = $region76
        $region75: #{tpu_custom_call.1} parent=55 // pred_region
          %375 = dma.done [#allocation9], 2048
        $region76: #{tpu_custom_call.1} parent=55 // pred_fallthru
          _
        %s376 = sand.u32 %s36, 1
        %s377 = scalar_lea.sflag [#allocation3], %s376
        %s378 = sand.u32 %s36, 1
        %s379 = smul.addr %s378, 8
        %s380 = scalar_lea.vmem [#allocation2], %s379
        %p381 = pneg %p49
        %p382 = pneg %p46
        %p383 = pneg %p70
        %p384 = pneg %p67
        %p385 = pneg %p91
        %p386 = pneg %p88
        %p387 = pneg %p112
        %p388 = pneg %p109
        %p389 = pneg %p133
        %p390 = pneg %p130
        %p391 = pneg %p154
        %p392 = pneg %p151
        %p393 = pneg %p175
        %p394 = pneg %p172
        %p395 = pneg %p196
        %p396 = pneg %p193
        %p397 = pneg %p217
        %p398 = pneg %p214
        %p399 = pneg %p243
        %p400 = pneg %p240
        %s401 = sand.u32 %s230, 1
        %s402 = scalar_lea.sflag [#allocation4], %s401
        %s403 = sand.u32 %s230, 1
        %s404 = smul.addr %s403, 8
        %s405 = scalar_lea.vmem [#allocation11], %s404
        %v407 = vld [vmem:[%s355] sm:$0xff]
        %v408 = vpack.c.bf16 %v407, %v407
        %v409 = vld [vmem:[#allocation5] sm:$0xff]
        %v410 = vld [vmem:[#allocation5 + $0x8] sm:$0xff]
        %v411 = vld [vmem:[#allocation5 + $0x10] sm:$0xff]
        %v412 = vld [vmem:[#allocation5 + $0x18] sm:$0xff]
        %v413 = vld [vmem:[#allocation5 + $0x20] sm:$0xff]
        %v414 = vld [vmem:[#allocation5 + $0x28] sm:$0xff]
        %v415 = vld [vmem:[#allocation5 + $0x30] sm:$0xff]
        %v416 = vld [vmem:[#allocation5 + $0x38] sm:$0xff]
        %v417 = vld [vmem:[#allocation5 + $0x40] sm:$0xff]
        %v418 = vld [vmem:[#allocation5 + $0x48] sm:$0xff]
        %v419 = vld [vmem:[#allocation5 + $0x50] sm:$0xff]
        %v420 = vld [vmem:[#allocation5 + $0x58] sm:$0xff]
        %v421 = vld [vmem:[#allocation5 + $0x60] sm:$0xff]
        %v422 = vld [vmem:[#allocation5 + $0x68] sm:$0xff]
        %v423 = vld [vmem:[#allocation5 + $0x70] sm:$0xff]
        %v424 = vld [vmem:[#allocation5 + $0x78] sm:$0xff]
        %v425 = vld [vmem:[%s2] sm:$0x3]
        %v427 = vlaneseq
        %v428 = vshrl.u32 %v427, 7
        %v429 = vsub.s32 0, %v428
        %v430 = vrot.slane %v425, %v429
        %v431 = vlaneseq
        %v432 = vshrl.u32 %v431, 7
        %v433 = vsub.s32 1, %v432
        %v434 = vrot.slane %v425, %v433
        %v453 = vunpack.c.l.b16 %v409
        %v454 = vunpack.c.h.b16 %v409
        %v455 = vunpack.c.l.b16 %v410
        %v456 = vunpack.c.h.b16 %v410
        %v457 = vunpack.c.l.b16 %v411
        %v458 = vunpack.c.h.b16 %v411
        %v459 = vunpack.c.l.b16 %v412
        %v460 = vunpack.c.h.b16 %v412
        %v461 = vunpack.c.l.b16 %v413
        %v462 = vunpack.c.h.b16 %v413
        %v463 = vunpack.c.l.b16 %v414
        %v464 = vunpack.c.h.b16 %v414
        %v465 = vunpack.c.l.b16 %v415
        %v466 = vunpack.c.h.b16 %v415
        %v467 = vunpack.c.l.b16 %v416
        %v468 = vunpack.c.h.b16 %v416
        %v469 = vunpack.c.l.b16 %v417
        %v470 = vunpack.c.h.b16 %v417
        %v471 = vunpack.c.l.b16 %v418
        %v472 = vunpack.c.h.b16 %v418
        %v473 = vunpack.c.l.b16 %v419
        %v474 = vunpack.c.h.b16 %v419
        %v475 = vunpack.c.l.b16 %v420
        %v476 = vunpack.c.h.b16 %v420
        %v477 = vunpack.c.l.b16 %v421
        %v478 = vunpack.c.h.b16 %v421
        %v479 = vunpack.c.l.b16 %v422
        %v480 = vunpack.c.h.b16 %v422
        %v481 = vunpack.c.l.b16 %v423
        %v482 = vunpack.c.h.b16 %v423
        %v483 = vunpack.c.l.b16 %v424
        %v484 = vunpack.c.h.b16 %v424
        %v485 = vpack.c.b16 %v455, %v453
        %v486 = vpack.c.b16 %v456, %v454
        %v487 = vpack.c.b16 %v459, %v457
        %v488 = vpack.c.b16 %v460, %v458
        %v489 = vpack.c.b16 %v463, %v461
        %v490 = vpack.c.b16 %v464, %v462
        %v491 = vpack.c.b16 %v467, %v465
        %v492 = vpack.c.b16 %v468, %v466
        %v493 = vpack.c.b16 %v471, %v469
        %v494 = vpack.c.b16 %v472, %v470
        %v495 = vpack.c.b16 %v475, %v473
        %v496 = vpack.c.b16 %v476, %v474
        %v497 = vpack.c.b16 %v479, %v477
        %v498 = vpack.c.b16 %v480, %v478
        %v499 = vpack.c.b16 %v483, %v481
        %v500 = vpack.c.b16 %v484, %v482
        %517 = vmatprep.subr.bf16.mxu0 %v486
        %518 = vmatpush1.bf16.msra.mxu0 %v485
        %519 = vmatprep.subr.bf16.mxu0 %v488
        %520 = vmatpush1.bf16.msra.mxu0 %v487
        %521 = vmatprep.subr.bf16.mxu0 %v490
        %522 = vmatpush1.bf16.msra.mxu0 %v489
        %523 = vmatprep.subr.bf16.mxu0 %v492
        %524 = vmatpush1.bf16.msra.mxu0 %v491
        %525 = vmatprep.subr.bf16.mxu0 %v494
        %526 = vmatpush1.bf16.msra.mxu0 %v493
        %527 = vmatprep.subr.bf16.mxu0 %v496
        %528 = vmatpush1.bf16.msra.mxu0 %v495
        %529 = vmatprep.subr.bf16.mxu0 %v498
        %530 = vmatpush1.bf16.msra.mxu0 %v497
        %531 = vmatprep.subr.bf16.mxu0 %v500
        %532 = vmatpush1.bf16.msra.mxu0 %v499
        %533 = vmatprep.subr.bf16.mxu0 0
        %534 = vmatpush1.bf16.msra.mxu0 0
        %535 = vmatprep.subr.bf16.mxu0 0
        %536 = vmatpush1.bf16.msra.mxu0 0
        %537 = vmatprep.subr.bf16.mxu0 0
        %538 = vmatpush1.bf16.msra.mxu0 0
        %539 = vmatprep.subr.bf16.mxu0 0
        %540 = vmatpush1.bf16.msra.mxu0 0
        %541 = vmatprep.subr.bf16.mxu0 0
        %542 = vmatpush1.bf16.msra.mxu0 0
        %543 = vmatprep.subr.bf16.mxu0 0
        %544 = vmatpush1.bf16.msra.mxu0 0
        %545 = vmatprep.subr.bf16.mxu0 0
        %546 = vmatpush1.bf16.msra.mxu0 0
        %547 = vmatprep.subr.bf16.mxu0 0
        %548 = vmatpush1.bf16.msra.mxu0 0
        %549 = vmatprep.mubr.bf16.mxu0 0
        %550 = vmatmul.mubr.bf16.gmra.mrb[0].mxu0 %v408
        %v551 = vpop.f32.mrb[0].mxu0
        %v552 = vadd.f32 %v430, %v551
        %v553 = vpop.f32.mrb[0].mxu0
        %v554 = vadd.f32 %v434, %v553
        %v555 = vpop.f32.mrb[0].mxu0
        %v556 = vpop.f32.mrb[0].mxu0
        %557 = vdwg.mxu0
        %v558 = vmax.f32 %v552, 0.0
        %v559 = vmax.f32 %v554, 0.0
        %v560 = vpack.c.bf16 %v558, %v558
        %v561 = vpack.c.bf16 %v559, %v559
        %v562 = vld [vmem:[#allocation7] sm:$0xf]
        %v563 = vld [vmem:[#allocation7 + $0x4] sm:$0xf]
        %v564 = vld [vmem:[#allocation7 + $0x8] sm:$0xf]
        %v565 = vld [vmem:[#allocation7 + $0xc] sm:$0xf]
        %v566 = vld [vmem:[#allocation7 + $0x10] sm:$0xf]
        %v567 = vld [vmem:[#allocation7 + $0x14] sm:$0xf]
        %v568 = vld [vmem:[#allocation7 + $0x18] sm:$0xf]
        %v569 = vld [vmem:[#allocation7 + $0x1c] sm:$0xf]
        %v570 = vld [vmem:[#allocation7 + $0x20] sm:$0xf]
        %v571 = vld [vmem:[#allocation7 + $0x24] sm:$0xf]
        %v572 = vld [vmem:[#allocation7 + $0x28] sm:$0xf]
        %v573 = vld [vmem:[#allocation7 + $0x2c] sm:$0xf]
        %v574 = vld [vmem:[#allocation7 + $0x30] sm:$0xf]
        %v575 = vld [vmem:[#allocation7 + $0x34] sm:$0xf]
        %v576 = vld [vmem:[#allocation7 + $0x38] sm:$0xf]
        %v577 = vld [vmem:[#allocation7 + $0x3c] sm:$0xf]
        %v578 = vld [vmem:[#allocation7 + $0x40] sm:$0xf]
        %v579 = vld [vmem:[#allocation7 + $0x44] sm:$0xf]
        %v580 = vld [vmem:[#allocation7 + $0x48] sm:$0xf]
        %v581 = vld [vmem:[#allocation7 + $0x4c] sm:$0xf]
        %v582 = vld [vmem:[#allocation7 + $0x50] sm:$0xf]
        %v583 = vld [vmem:[#allocation7 + $0x54] sm:$0xf]
        %v584 = vld [vmem:[#allocation7 + $0x58] sm:$0xf]
        %v585 = vld [vmem:[#allocation7 + $0x5c] sm:$0xf]
        %v586 = vld [vmem:[#allocation7 + $0x60] sm:$0xf]
        %v587 = vld [vmem:[#allocation7 + $0x64] sm:$0xf]
        %v588 = vld [vmem:[#allocation7 + $0x68] sm:$0xf]
        %v589 = vld [vmem:[#allocation7 + $0x6c] sm:$0xf]
        %v590 = vld [vmem:[#allocation7 + $0x70] sm:$0xf]
        %v591 = vld [vmem:[#allocation7 + $0x74] sm:$0xf]
        %v592 = vld [vmem:[#allocation7 + $0x78] sm:$0xf]
        %v593 = vld [vmem:[#allocation7 + $0x7c] sm:$0xf]
        %v594 = vld [vmem:[%s4] sm:$0x1]
        %v596 = vlaneseq
        %v597 = vshrl.u32 %v596, 7
        %v598 = vsub.s32 0, %v597
        %v599 = vrot.slane %v594, %v598
        %v633 = vunpack.c.l.b16 %v562
        %v634 = vunpack.c.l.b16 %v563
        %v635 = vunpack.c.l.b16 %v564
        %v636 = vunpack.c.l.b16 %v565
        %v637 = vunpack.c.l.b16 %v566
        %v638 = vunpack.c.l.b16 %v567
        %v639 = vunpack.c.l.b16 %v568
        %v640 = vunpack.c.l.b16 %v569
        %v641 = vunpack.c.l.b16 %v570
        %v642 = vunpack.c.l.b16 %v571
        %v643 = vunpack.c.l.b16 %v572
        %v644 = vunpack.c.l.b16 %v573
        %v645 = vunpack.c.l.b16 %v574
        %v646 = vunpack.c.l.b16 %v575
        %v647 = vunpack.c.l.b16 %v576
        %v648 = vunpack.c.l.b16 %v577
        %v649 = vunpack.c.l.b16 %v578
        %v650 = vunpack.c.l.b16 %v579
        %v651 = vunpack.c.l.b16 %v580
        %v652 = vunpack.c.l.b16 %v581
        %v653 = vunpack.c.l.b16 %v582
        %v654 = vunpack.c.l.b16 %v583
        %v655 = vunpack.c.l.b16 %v584
        %v656 = vunpack.c.l.b16 %v585
        %v657 = vunpack.c.l.b16 %v586
        %v658 = vunpack.c.l.b16 %v587
        %v659 = vunpack.c.l.b16 %v588
        %v660 = vunpack.c.l.b16 %v589
        %v661 = vunpack.c.l.b16 %v590
        %v662 = vunpack.c.l.b16 %v591
        %v663 = vunpack.c.l.b16 %v592
        %v664 = vunpack.c.l.b16 %v593
        %v665 = vpack.c.b16 %v634, %v633
        %v666 = vpack.c.b16 %v636, %v635
        %v667 = vpack.c.b16 %v638, %v637
        %v668 = vpack.c.b16 %v640, %v639
        %v669 = vpack.c.b16 %v642, %v641
        %v670 = vpack.c.b16 %v644, %v643
        %v671 = vpack.c.b16 %v646, %v645
        %v672 = vpack.c.b16 %v648, %v647
        %v673 = vpack.c.b16 %v650, %v649
        %v674 = vpack.c.b16 %v652, %v651
        %v675 = vpack.c.b16 %v654, %v653
        %v676 = vpack.c.b16 %v656, %v655
        %v677 = vpack.c.b16 %v658, %v657
        %v678 = vpack.c.b16 %v660, %v659
        %v679 = vpack.c.b16 %v662, %v661
        %v680 = vpack.c.b16 %v664, %v663
        %697 = vmatprep.subr.bf16.mxu0 0
        %698 = vmatpush1.bf16.msra.mxu0 %v665
        %699 = vmatprep.subr.bf16.mxu0 0
        %700 = vmatpush1.bf16.msra.mxu0 %v666
        %701 = vmatprep.subr.bf16.mxu0 0
        %702 = vmatpush1.bf16.msra.mxu0 %v667
        %703 = vmatprep.subr.bf16.mxu0 0
        %704 = vmatpush1.bf16.msra.mxu0 %v668
        %705 = vmatprep.subr.bf16.mxu0 0
        %706 = vmatpush1.bf16.msra.mxu0 %v669
        %707 = vmatprep.subr.bf16.mxu0 0
        %708 = vmatpush1.bf16.msra.mxu0 %v670
        %709 = vmatprep.subr.bf16.mxu0 0
        %710 = vmatpush1.bf16.msra.mxu0 %v671
        %711 = vmatprep.subr.bf16.mxu0 0
        %712 = vmatpush1.bf16.msra.mxu0 %v672
        %713 = vmatprep.subr.bf16.mxu0 0
        %714 = vmatpush1.bf16.msra.mxu0 %v673
        %715 = vmatprep.subr.bf16.mxu0 0
        %716 = vmatpush1.bf16.msra.mxu0 %v674
        %717 = vmatprep.subr.bf16.mxu0 0
        %718 = vmatpush1.bf16.msra.mxu0 %v675
        %719 = vmatprep.subr.bf16.mxu0 0
        %720 = vmatpush1.bf16.msra.mxu0 %v676
        %721 = vmatprep.subr.bf16.mxu0 0
        %722 = vmatpush1.bf16.msra.mxu0 %v677
        %723 = vmatprep.subr.bf16.mxu0 0
        %724 = vmatpush1.bf16.msra.mxu0 %v678
        %725 = vmatprep.subr.bf16.mxu0 0
        %726 = vmatpush1.bf16.msra.mxu0 %v679
        %727 = vmatprep.subr.bf16.mxu0 0
        %728 = vmatpush1.bf16.msra.mxu0 %v680
        %729 = vmatprep.mubr.bf16.mxu0 %v561
        %730 = vmatmul.mubr.bf16.gmra.mrb[0].mxu0 %v560
        %v731 = vpop.f32.mrb[0].mxu0
        %v732 = vadd.f32 %v599, %v731
        %v733 = vpop.f32.mrb[0].mxu0
        %v734 = vpop.f32.mrb[0].mxu0
        %v735 = vpop.f32.mrb[0].mxu0
        %736 = vdwg.mxu0
        %v737 = vmax.f32 %v732, 0.0
        %v738 = vpack.c.bf16 %v737, %v737
        %v739 = vld [vmem:[#allocation8] sm:$0xff]
        %v740 = vld [vmem:[#allocation8 + $0x8] sm:$0xff]
        %v741 = vld [vmem:[#allocation8 + $0x10] sm:$0xff]
        %v742 = vld [vmem:[#allocation8 + $0x18] sm:$0xff]
        %v743 = vld [vmem:[#allocation8 + $0x20] sm:$0xff]
        %v744 = vld [vmem:[#allocation8 + $0x28] sm:$0xff]
        %v745 = vld [vmem:[#allocation8 + $0x30] sm:$0xff]
        %v746 = vld [vmem:[#allocation8 + $0x38] sm:$0xff]
        %v747 = vld [vmem:[#allocation8 + $0x40] sm:$0xff]
        %v748 = vld [vmem:[#allocation8 + $0x48] sm:$0xff]
        %v749 = vld [vmem:[#allocation8 + $0x50] sm:$0xff]
        %v750 = vld [vmem:[#allocation8 + $0x58] sm:$0xff]
        %v751 = vld [vmem:[#allocation8 + $0x60] sm:$0xff]
        %v752 = vld [vmem:[#allocation8 + $0x68] sm:$0xff]
        %v753 = vld [vmem:[#allocation8 + $0x70] sm:$0xff]
        %v754 = vld [vmem:[#allocation8 + $0x78] sm:$0xff]
        %v755 = vld [vmem:[%s6] sm:$0x3]
        %v757 = vlaneseq
        %v758 = vshrl.u32 %v757, 7
        %v759 = vsub.s32 0, %v758
        %v760 = vrot.slane %v755, %v759
        %v761 = vlaneseq
        %v762 = vshrl.u32 %v761, 7
        %v763 = vsub.s32 1, %v762
        %v764 = vrot.slane %v755, %v763
        %v783 = vunpack.c.l.b16 %v739
        %v784 = vunpack.c.h.b16 %v739
        %v785 = vunpack.c.l.b16 %v740
        %v786 = vunpack.c.h.b16 %v740
        %v787 = vunpack.c.l.b16 %v741
        %v788 = vunpack.c.h.b16 %v741
        %v789 = vunpack.c.l.b16 %v742
        %v790 = vunpack.c.h.b16 %v742
        %v791 = vunpack.c.l.b16 %v743
        %v792 = vunpack.c.h.b16 %v743
        %v793 = vunpack.c.l.b16 %v744
        %v794 = vunpack.c.h.b16 %v744
        %v795 = vunpack.c.l.b16 %v745
        %v796 = vunpack.c.h.b16 %v745
        %v797 = vunpack.c.l.b16 %v746
        %v798 = vunpack.c.h.b16 %v746
        %v799 = vunpack.c.l.b16 %v747
        %v800 = vunpack.c.h.b16 %v747
        %v801 = vunpack.c.l.b16 %v748
        %v802 = vunpack.c.h.b16 %v748
        %v803 = vunpack.c.l.b16 %v749
        %v804 = vunpack.c.h.b16 %v749
        %v805 = vunpack.c.l.b16 %v750
        %v806 = vunpack.c.h.b16 %v750
        %v807 = vunpack.c.l.b16 %v751
        %v808 = vunpack.c.h.b16 %v751
        %v809 = vunpack.c.l.b16 %v752
        %v810 = vunpack.c.h.b16 %v752
        %v811 = vunpack.c.l.b16 %v753
        %v812 = vunpack.c.h.b16 %v753
        %v813 = vunpack.c.l.b16 %v754
        %v814 = vunpack.c.h.b16 %v754
        %v815 = vpack.c.b16 %v785, %v783
        %v816 = vpack.c.b16 %v786, %v784
        %v817 = vpack.c.b16 %v789, %v787
        %v818 = vpack.c.b16 %v790, %v788
        %v819 = vpack.c.b16 %v793, %v791
        %v820 = vpack.c.b16 %v794, %v792
        %v821 = vpack.c.b16 %v797, %v795
        %v822 = vpack.c.b16 %v798, %v796
        %v823 = vpack.c.b16 %v801, %v799
        %v824 = vpack.c.b16 %v802, %v800
        %v825 = vpack.c.b16 %v805, %v803
        %v826 = vpack.c.b16 %v806, %v804
        %v827 = vpack.c.b16 %v809, %v807
        %v828 = vpack.c.b16 %v810, %v808
        %v829 = vpack.c.b16 %v813, %v811
        %v830 = vpack.c.b16 %v814, %v812
        %847 = vmatprep.subr.bf16.mxu0 %v816
        %848 = vmatpush1.bf16.msra.mxu0 %v815
        %849 = vmatprep.subr.bf16.mxu0 %v818
        %850 = vmatpush1.bf16.msra.mxu0 %v817
        %851 = vmatprep.subr.bf16.mxu0 %v820
        %852 = vmatpush1.bf16.msra.mxu0 %v819
        %853 = vmatprep.subr.bf16.mxu0 %v822
        %854 = vmatpush1.bf16.msra.mxu0 %v821
        %855 = vmatprep.subr.bf16.mxu0 %v824
        %856 = vmatpush1.bf16.msra.mxu0 %v823
        %857 = vmatprep.subr.bf16.mxu0 %v826
        %858 = vmatpush1.bf16.msra.mxu0 %v825
        %859 = vmatprep.subr.bf16.mxu0 %v828
        %860 = vmatpush1.bf16.msra.mxu0 %v827
        %861 = vmatprep.subr.bf16.mxu0 %v830
        %862 = vmatpush1.bf16.msra.mxu0 %v829
        %863 = vmatprep.subr.bf16.mxu0 0
        %864 = vmatpush1.bf16.msra.mxu0 0
        %865 = vmatprep.subr.bf16.mxu0 0
        %866 = vmatpush1.bf16.msra.mxu0 0
        %867 = vmatprep.subr.bf16.mxu0 0
        %868 = vmatpush1.bf16.msra.mxu0 0
        %869 = vmatprep.subr.bf16.mxu0 0
        %870 = vmatpush1.bf16.msra.mxu0 0
        %871 = vmatprep.subr.bf16.mxu0 0
        %872 = vmatpush1.bf16.msra.mxu0 0
        %873 = vmatprep.subr.bf16.mxu0 0
        %874 = vmatpush1.bf16.msra.mxu0 0
        %875 = vmatprep.subr.bf16.mxu0 0
        %876 = vmatpush1.bf16.msra.mxu0 0
        %877 = vmatprep.subr.bf16.mxu0 0
        %878 = vmatpush1.bf16.msra.mxu0 0
        %879 = vmatprep.mubr.bf16.mxu0 0
        %880 = vmatmul.mubr.bf16.gmra.mrb[0].mxu0 %v738
        %v881 = vpop.f32.mrb[0].mxu0
        %v882 = vadd.f32 %v760, %v881
        %v883 = vpop.f32.mrb[0].mxu0
        %v884 = vadd.f32 %v764, %v883
        %v885 = vpop.f32.mrb[0].mxu0
        %v886 = vpop.f32.mrb[0].mxu0
        %887 = vdwg.mxu0
        %v888 = vmax.f32 %v882, 0.0
        %v889 = vmax.f32 %v884, 0.0
        %v890 = vpack.c.bf16 %v888, %v888
        %v891 = vpack.c.bf16 %v889, %v889
        %v892 = vld [vmem:[#allocation10] sm:$0xf]
        %v893 = vld [vmem:[#allocation10 + $0x4] sm:$0xf]
        %v894 = vld [vmem:[#allocation10 + $0x8] sm:$0xf]
        %v895 = vld [vmem:[#allocation10 + $0xc] sm:$0xf]
        %v896 = vld [vmem:[#allocation10 + $0x10] sm:$0xf]
        %v897 = vld [vmem:[#allocation10 + $0x14] sm:$0xf]
        %v898 = vld [vmem:[#allocation10 + $0x18] sm:$0xf]
        %v899 = vld [vmem:[#allocation10 + $0x1c] sm:$0xf]
        %v900 = vld [vmem:[#allocation10 + $0x20] sm:$0xf]
        %v901 = vld [vmem:[#allocation10 + $0x24] sm:$0xf]
        %v902 = vld [vmem:[#allocation10 + $0x28] sm:$0xf]
        %v903 = vld [vmem:[#allocation10 + $0x2c] sm:$0xf]
        %v904 = vld [vmem:[#allocation10 + $0x30] sm:$0xf]
        %v905 = vld [vmem:[#allocation10 + $0x34] sm:$0xf]
        %v906 = vld [vmem:[#allocation10 + $0x38] sm:$0xf]
        %v907 = vld [vmem:[#allocation10 + $0x3c] sm:$0xf]
        %v908 = vld [vmem:[#allocation10 + $0x40] sm:$0xf]
        %v909 = vld [vmem:[#allocation10 + $0x44] sm:$0xf]
        %v910 = vld [vmem:[#allocation10 + $0x48] sm:$0xf]
        %v911 = vld [vmem:[#allocation10 + $0x4c] sm:$0xf]
        %v912 = vld [vmem:[#allocation10 + $0x50] sm:$0xf]
        %v913 = vld [vmem:[#allocation10 + $0x54] sm:$0xf]
        %v914 = vld [vmem:[#allocation10 + $0x58] sm:$0xf]
        %v915 = vld [vmem:[#allocation10 + $0x5c] sm:$0xf]
        %v916 = vld [vmem:[#allocation10 + $0x60] sm:$0xf]
        %v917 = vld [vmem:[#allocation10 + $0x64] sm:$0xf]
        %v918 = vld [vmem:[#allocation10 + $0x68] sm:$0xf]
        %v919 = vld [vmem:[#allocation10 + $0x6c] sm:$0xf]
        %v920 = vld [vmem:[#allocation10 + $0x70] sm:$0xf]
        %v921 = vld [vmem:[#allocation10 + $0x74] sm:$0xf]
        %v922 = vld [vmem:[#allocation10 + $0x78] sm:$0xf]
        %v923 = vld [vmem:[#allocation10 + $0x7c] sm:$0xf]
        %v924 = vld [vmem:[%s8] sm:$0x1]
        %v926 = vlaneseq
        %v927 = vshrl.u32 %v926, 7
        %v928 = vsub.s32 0, %v927
        %v929 = vrot.slane %v924, %v928
        %v963 = vunpack.c.l.b16 %v892
        %v964 = vunpack.c.l.b16 %v893
        %v965 = vunpack.c.l.b16 %v894
        %v966 = vunpack.c.l.b16 %v895
        %v967 = vunpack.c.l.b16 %v896
        %v968 = vunpack.c.l.b16 %v897
        %v969 = vunpack.c.l.b16 %v898
        %v970 = vunpack.c.l.b16 %v899
        %v971 = vunpack.c.l.b16 %v900
        %v972 = vunpack.c.l.b16 %v901
        %v973 = vunpack.c.l.b16 %v902
        %v974 = vunpack.c.l.b16 %v903
        %v975 = vunpack.c.l.b16 %v904
        %v976 = vunpack.c.l.b16 %v905
        %v977 = vunpack.c.l.b16 %v906
        %v978 = vunpack.c.l.b16 %v907
        %v979 = vunpack.c.l.b16 %v908
        %v980 = vunpack.c.l.b16 %v909
        %v981 = vunpack.c.l.b16 %v910
        %v982 = vunpack.c.l.b16 %v911
        %v983 = vunpack.c.l.b16 %v912
        %v984 = vunpack.c.l.b16 %v913
        %v985 = vunpack.c.l.b16 %v914
        %v986 = vunpack.c.l.b16 %v915
        %v987 = vunpack.c.l.b16 %v916
        %v988 = vunpack.c.l.b16 %v917
        %v989 = vunpack.c.l.b16 %v918
        %v990 = vunpack.c.l.b16 %v919
        %v991 = vunpack.c.l.b16 %v920
        %v992 = vunpack.c.l.b16 %v921
        %v993 = vunpack.c.l.b16 %v922
        %v994 = vunpack.c.l.b16 %v923
        %v995 = vpack.c.b16 %v964, %v963
        %v996 = vpack.c.b16 %v966, %v965
        %v997 = vpack.c.b16 %v968, %v967
        %v998 = vpack.c.b16 %v970, %v969
        %v999 = vpack.c.b16 %v972, %v971
        %v1000 = vpack.c.b16 %v974, %v973
        %v1001 = vpack.c.b16 %v976, %v975
        %v1002 = vpack.c.b16 %v978, %v977
        %v1003 = vpack.c.b16 %v980, %v979
        %v1004 = vpack.c.b16 %v982, %v981
        %v1005 = vpack.c.b16 %v984, %v983
        %v1006 = vpack.c.b16 %v986, %v985
        %v1007 = vpack.c.b16 %v988, %v987
        %v1008 = vpack.c.b16 %v990, %v989
        %v1009 = vpack.c.b16 %v992, %v991
        %v1010 = vpack.c.b16 %v994, %v993
        %1027 = vmatprep.subr.bf16.mxu0 0
        %1028 = vmatpush1.bf16.msra.mxu0 %v995
        %1029 = vmatprep.subr.bf16.mxu0 0
        %1030 = vmatpush1.bf16.msra.mxu0 %v996
        %1031 = vmatprep.subr.bf16.mxu0 0
        %1032 = vmatpush1.bf16.msra.mxu0 %v997
        %1033 = vmatprep.subr.bf16.mxu0 0
        %1034 = vmatpush1.bf16.msra.mxu0 %v998
        %1035 = vmatprep.subr.bf16.mxu0 0
        %1036 = vmatpush1.bf16.msra.mxu0 %v999
        %1037 = vmatprep.subr.bf16.mxu0 0
        %1038 = vmatpush1.bf16.msra.mxu0 %v1000
        %1039 = vmatprep.subr.bf16.mxu0 0
        %1040 = vmatpush1.bf16.msra.mxu0 %v1001
        %1041 = vmatprep.subr.bf16.mxu0 0
        %1042 = vmatpush1.bf16.msra.mxu0 %v1002
        %1043 = vmatprep.subr.bf16.mxu0 0
        %1044 = vmatpush1.bf16.msra.mxu0 %v1003
        %1045 = vmatprep.subr.bf16.mxu0 0
        %1046 = vmatpush1.bf16.msra.mxu0 %v1004
        %1047 = vmatprep.subr.bf16.mxu0 0
        %1048 = vmatpush1.bf16.msra.mxu0 %v1005
        %1049 = vmatprep.subr.bf16.mxu0 0
        %1050 = vmatpush1.bf16.msra.mxu0 %v1006
        %1051 = vmatprep.subr.bf16.mxu0 0
        %1052 = vmatpush1.bf16.msra.mxu0 %v1007
        %1053 = vmatprep.subr.bf16.mxu0 0
        %1054 = vmatpush1.bf16.msra.mxu0 %v1008
        %1055 = vmatprep.subr.bf16.mxu0 0
        %1056 = vmatpush1.bf16.msra.mxu0 %v1009
        %1057 = vmatprep.subr.bf16.mxu0 0
        %1058 = vmatpush1.bf16.msra.mxu0 %v1010
        %1059 = vmatprep.mubr.bf16.mxu0 %v891
        %1060 = vmatmul.mubr.bf16.gmra.mrb[0].mxu0 %v890
        %v1061 = vpop.f32.mrb[0].mxu0
        %v1062 = vadd.f32 %v929, %v1061
        %v1063 = vpop.f32.mrb[0].mxu0
        %v1064 = vpop.f32.mrb[0].mxu0
        %v1065 = vpop.f32.mrb[0].mxu0
        %1066 = vdwg.mxu0
        %v1067 = vmax.f32 %v1062, 0.0
        %1068 = vst [vmem:[%s405] sm:$0xff] %v1067
        %s1069 = sand.u32 %s230, 1
        %s1070 = scalar_lea.sflag [#allocation4], %s1069
        %s1071 = sand.u32 %s230, 1
        %s1072 = smul.addr %s1071, 8
        %s1073 = scalar_lea.vmem [#allocation11], %s1072
        // Predicated region
        $region77: #{tpu_custom_call.1} parent=55 // pred_check
          %p1074 = pneg %p240
        $region78: #{tpu_custom_call.1} parent=55 // pred_check_branch
          %1076 = sbr.rel (%p1074) target = $region80
        $region79: #{tpu_custom_call.1} parent=55 // pred_region
          %s1078 = ssub.s32 128, 128
          %1079 = vsyncadd %s1070, %s1078
          %s1080 = smul.addr %s28, 128
          %s1081 = scalar_lea.hbm %s9, %s1080
          %s1083 = sshll.u32 %s1073, 4
          %s1084 = int_to_ptr.vmem [resolvable:$true] %s1083
          %1086 = dma.vmem_to_hbm [thread:$0]  %s1084, 128, %s1081, %s1070
        $region80: #{tpu_custom_call.1} parent=55 // pred_fallthru
          _
      $region56: #{tpu_custom_call.1} parent=5 // pred_fallthru
        _
      %p1087 = scmp.le.s32.totalorder 2, %s23
      // Predicated region
      $region81: #{tpu_custom_call.1} parent=5 // pred_check
        %p1088 = pneg %p1087
      $region82: #{tpu_custom_call.1} parent=5 // pred_check_branch
        %1090 = sbr.rel (%p1088) target = $region84
      $region83: #{tpu_custom_call.1} parent=5 // pred_region
        %s1091 = ssub.s32 %s23, 2
        // Predicated region
        $region85: #{tpu_custom_call.1} parent=83 // pred_check
          %p1092 = pneg %p246
        $region86: #{tpu_custom_call.1} parent=83 // pred_check_branch
          %1094 = sbr.rel (%p1092) target = $region88
        $region87: #{tpu_custom_call.1} parent=83 // pred_region
          %s1095 = sand.u32 %s231, 1
          %s1096 = scalar_lea.sflag [#allocation4], %s1095
          %s1097 = sand.u32 %s231, 1
          %s1098 = smul.addr %s1097, 8
          %s1099 = scalar_lea.vmem [#allocation11], %s1098
          %1100 = dma.done %s1096, 128
        $region88: #{tpu_custom_call.1} parent=83 // pred_fallthru
          _
      $region84: #{tpu_custom_call.1} parent=5 // pred_fallthru
        _
    $region6: #{tpu_custom_call.1} parent=1 // loop_footer
      %s27 = sadd.s32 1, %s23
    $region7: #{tpu_custom_call.1} parent=1 // loop_footer_branch
      %22 = sbr.rel target = $region3
    $region8: #{tpu_custom_call.1} parent=1 // loop_exit
      _
    %1101 = vsyncpa [#allocation3], 1
    %s1102 = scalar_lea.sflag [#allocation3], 1
    %1103 = vsyncpa %s1102, 1
    %1104 = vsyncpa [#allocation6], 1
    %1105 = vsyncpa [#allocation9], 1
    %1106 = vsyncpa [#allocation4], 1
    %s1107 = scalar_lea.sflag [#allocation4], 1
    %1108 = vsyncpa %s1107, 1

</llo_original>
